<compile_context>
chip_gen: v5e
topology: v5e:2x2
jax: 0.10.0
libtpu: 0.0.40
codegen_flags: <defaults>
</compile_context>

<pallas_src>
import jax
import jax.numpy as jnp
from jax.experimental import pallas as pl
from jax.experimental.pallas import tpu as pltpu

# ----------------------- model dimensions (small, synthetic) ----------------
B = 2        # batch
S = 8        # sequence length (module uses 512; shrunk for the example)
H = 128      # hidden dim (DistilBERT uses 768; 128 keeps the lane axis full)
VOCAB = 64   # vocab size (DistilBERT uses 30522; shrunk for the example)


# ---- Kernel 1: fused dense projection + vocab-weighted [:,1:] pooling ------
def _encode_pool_kernel(emb_ref, w_ref, b_ref, tw_ref, mask_ref, o_ref):
    # emb_ref:  (1, S, H) bf16   token embeddings of one sequence
    # w_ref:    (H, H)    bf16   projection weights (resident across grid)
    # b_ref:    (1, H)    f32    projection bias
    # tw_ref:   (1, 1, S) f32    gathered vocab weights for this sequence
    # mask_ref: (1, 1, S) f32    attention mask for this sequence
    # o_ref:    (1, 1, H) f32    pooled embedding
    emb = emb_ref[0]                                                  # (S, H)
    h = jnp.dot(emb, w_ref[...],
                preferred_element_type=jnp.float32) + b_ref[...]     # (S, H) f32

    # implement the [:, 1:] token sum by zeroing token 0's weight (no sublane
    # relayout slice) and reducing over S via a matmul on the MXU.
    tok = jax.lax.broadcasted_iota(jnp.int32, (1, tw_ref.shape[-1]), 1)
    tw = jnp.where(tok >= 1, tw_ref[0], 0.0)                          # (1, S)
    pooled = jnp.dot(tw, h, preferred_element_type=jnp.float32)       # (1, H)

    # reciprocal(sum(attention_mask)) on the EUP.
    # NOTE: faithful to the reference — divides by the FULL mask sum (token 0
    # included) and would produce inf for an all-padded row.
    inv_len = pl.reciprocal(jnp.sum(mask_ref[0], axis=1, keepdims=True),
                            approx=True)                              # (1, 1)
    o_ref[0] = pooled * inv_len


def encode_and_pool(emb, proj_w, proj_b, tok_w, mask):
    """emb: (N,S,H) bf16; tok_w, mask: (N,S) f32 -> pooled embeddings (N,H) f32."""
    N, Sd, Hd = emb.shape
    tok_w3 = tok_w.reshape(N, 1, Sd)
    mask3 = mask.reshape(N, 1, Sd)

    flops = 2 * N * Sd * Hd * Hd + 2 * N * Sd * Hd
    bytes_accessed = (N * Sd * Hd * 2      # emb (bf16)
                      + Hd * Hd * 2        # proj_w (bf16)
                      + Hd * 4             # bias
                      + 2 * N * Sd * 4     # tok_w + mask
                      + N * Hd * 4)        # output

    out = pl.pallas_call(
        _encode_pool_kernel,
        out_shape=jax.ShapeDtypeStruct((N, 1, Hd), jnp.float32),
        grid=(N,),
        in_specs=[
            pl.BlockSpec((1, Sd, Hd), lambda i: (i, 0, 0)),
            pl.BlockSpec((Hd, Hd), lambda i: (0, 0)),
            pl.BlockSpec((1, Hd), lambda i: (0, 0)),
            pl.BlockSpec((1, 1, Sd), lambda i: (i, 0, 0)),
            pl.BlockSpec((1, 1, Sd), lambda i: (i, 0, 0)),
        ],
        out_specs=pl.BlockSpec((1, 1, Hd), lambda i: (i, 0, 0)),
        compiler_params=pltpu.CompilerParams(
            dimension_semantics=("parallel",),
            vmem_limit_bytes=32 * 1024 * 1024),
        cost_estimate=pl.CostEstimate(flops=flops,
                                      transcendentals=N,
                                      bytes_accessed=bytes_accessed),
    )(emb, proj_w, proj_b, tok_w3, mask3)
    return out.reshape(N, Hd)


# ------------------- Kernel 2: cosine embedding loss ------------------------
def _cos_loss_kernel(a_ref, p_ref, o_ref):
    # a_ref, p_ref: (n, H) f32 anchor / positive embeddings; o_ref: (1, 1) f32.
    a = a_ref[...]
    p = p_ref[...]
    eps = 1e-12
    dot = jnp.sum(a * p, axis=1, keepdims=True)
    sq_a = jnp.sum(a * a, axis=1, keepdims=True) + eps
    sq_p = jnp.sum(p * p, axis=1, keepdims=True) + eps
    cos = dot * jax.lax.rsqrt(sq_a * sq_p)                      # EUP rsqrt
    # Static label structure from the reference: labels[:n] = 1 and the
    # labels[n:n] = -1 slice is empty, so the (anchor, neg) rows carry target 0
    # and contribute 0.  reduction='mean' averages over all 2n rows.
    n = a_ref.shape[0]
    o_ref[...] = jnp.sum(1.0 - cos, keepdims=True) / (2.0 * n)


def cosine_embedding_loss(anchor_embs, pos_embs):
    N, Hd = anchor_embs.shape
    out = pl.pallas_call(
        _cos_loss_kernel,
        out_shape=jax.ShapeDtypeStruct((1, 1), jnp.float32),
        grid=(1,),
        in_specs=[pl.BlockSpec((N, Hd), lambda i: (0, 0)),
                  pl.BlockSpec((N, Hd), lambda i: (0, 0))],
        out_specs=pl.BlockSpec((1, 1), lambda i: (0, 0)),
    )(anchor_embs, pos_embs)
    return out[0, 0]


# --------------------------- forward (training path) ------------------------
def contrastive_forward(params, anchor_ids, anchor_mask, pos_ids, pos_mask,
                        perm_key):
    b, s = anchor_ids.shape

    # Stack anchor + positive sequences so a single fused kernel handles both
    # directions (one launch, weights read once).
    ids = jnp.concatenate([anchor_ids, pos_ids], axis=0)            # (2B, S)
    masks = jnp.concatenate([anchor_mask, pos_mask], axis=0).astype(jnp.float32)

    emb = params["word_emb"][ids].astype(jnp.bfloat16)              # (2B, S, H)
    tok_w = params["vocab_w"][ids, 0]                               # (2B, S)

    embs = encode_and_pool(emb,
                           params["proj_w"].astype(jnp.bfloat16),
                           params["proj_b"],
                           tok_w, masks)                            # (2B, H)
    anchor_embs = embs[:b]
    pos_embs = embs[b:]

    perm = jax.random.permutation(perm_key, b)
    neg_embs = anchor_embs[perm]

    # Loss: only the n positive pairs carry target 1; the n (anchor, neg) pairs
    # carry target 0 (empty labels[n:n] = -1 slice in the reference) and thus
    # contribute 0 — so no concatenation / duplicated-anchor traffic is needed.
    loss = cosine_embedding_loss(anchor_embs, pos_embs)
    return loss, anchor_embs, pos_embs, neg_embs


# --------------------------------- main --------------------------------------
if __name__ == "__main__":
    key = jax.random.PRNGKey(0)
    k_we, k_pw, k_pb, k_vw, k_aid, k_pid, k_perm = jax.random.split(key, 7)

    # deterministic synthetic parameters
    word_emb = jax.random.normal(k_we, (VOCAB, H), jnp.float32) * 0.02
    proj_w = jax.random.normal(k_pw, (H, H), jnp.float32) * 0.05
    proj_b = jax.random.normal(k_pb, (1, H), jnp.float32) * 0.01
    vocab_w = jax.random.normal(k_vw, (VOCAB, 1), jnp.float32)
    vocab_w = vocab_w.at[0].set(0.0)            # padding_idx=0
    params = {"word_emb": word_emb, "proj_w": proj_w,
              "proj_b": proj_b, "vocab_w": vocab_w}

    # deterministic synthetic inputs (token ids + attention masks)
    anchor_lens = jnp.array([S, S - 2])
    pos_lens = jnp.array([S - 1, S - 3])
    seq_pos = jnp.arange(S)[None, :]
    anchor_mask = (seq_pos < anchor_lens[:, None]).astype(jnp.int32)
    pos_mask = (seq_pos < pos_lens[:, None]).astype(jnp.int32)

    anchor_ids = jax.random.randint(k_aid, (B, S), 1, VOCAB) * anchor_mask
    pos_ids = jax.random.randint(k_pid, (B, S), 1, VOCAB) * pos_mask

    loss, a_embs, p_embs, n_embs = contrastive_forward(
        params, anchor_ids, anchor_mask, pos_ids, pos_mask, k_perm)

    jax.block_until_ready((loss, a_embs, p_embs, n_embs))
    assert a_embs.shape == (B, H) and p_embs.shape == (B, H) and n_embs.shape == (B, H)
    assert loss.shape == ()
    assert bool(jnp.isfinite(loss))
    print("KERNEL_OK")
</pallas_src>

<mosaic_0001>
module attributes {stable_mosaic.version = 11 : i64} {
  func.func @_encode_pool_kernel(%arg0: i32, %arg1: memref<1x8x128xbf16, #tpu.memory_space<vmem>>, %arg2: memref<128x128xbf16, #tpu.memory_space<vmem>>, %arg3: memref<1x128xf32, #tpu.memory_space<vmem>>, %arg4: memref<1x1x8xf32, #tpu.memory_space<vmem>>, %arg5: memref<1x1x8xf32, #tpu.memory_space<vmem>>, %arg6: memref<1x1x128xf32, #tpu.memory_space<vmem>>) attributes {dimension_semantics = [#tpu.dimension_semantics<parallel>], iteration_bounds = array<i64: 4>, scalar_prefetch = 0 : i64, scratch_operands = 0 : i64, tpu.core_type = #tpu.core_type<tc>, window_params = [{transform_indices = @transform_0, window_bounds = array<i64: 1, 8, 128>}, {pipeline_mode = #tpu.pipeline_mode<synchronous>, transform_indices = @transform_1, window_bounds = array<i64: 128, 128>}, {pipeline_mode = #tpu.pipeline_mode<synchronous>, transform_indices = @transform_2, window_bounds = array<i64: 1, 128>}, {transform_indices = @transform_3, window_bounds = array<i64: 1, 1, 8>}, {transform_indices = @transform_4, window_bounds = array<i64: 1, 1, 8>}, {transform_indices = @transform_5, window_bounds = array<i64: 1, 1, 128>}]} {
    %c0 = arith.constant 0 : index
    %c0_0 = arith.constant 0 : index
    %c0_1 = arith.constant 0 : index
    %0 = vector.load %arg1[%c0, %c0_0, %c0_1] : memref<1x8x128xbf16, #tpu.memory_space<vmem>>, vector<1x8x128xbf16>
    %1 = vector.shape_cast %0 : vector<1x8x128xbf16> to vector<8x128xbf16>
    %c0_2 = arith.constant 0 : index
    %c0_3 = arith.constant 0 : index
    %2 = vector.load %arg2[%c0_2, %c0_3] : memref<128x128xbf16, #tpu.memory_space<vmem>>, vector<128x128xbf16>
    %cst = arith.constant dense<0.000000e+00> : vector<8x128xf32>
    %3 = tpu.matmul %1, %2, %cst {dimension_numbers = #tpu.dot_dimension_numbers<[1], [0], [0], [1], [0, 0, 1, 1], [], []>} : vector<8x128xbf16>, vector<128x128xbf16>, vector<8x128xf32> -> vector<8x128xf32>
    %c0_4 = arith.constant 0 : index
    %c0_5 = arith.constant 0 : index
    %4 = vector.load %arg3[%c0_4, %c0_5] : memref<1x128xf32, #tpu.memory_space<vmem>>, vector<1x128xf32>
    %5 = vector.broadcast %4 : vector<1x128xf32> to vector<8x128xf32>
    %6 = arith.addf %3, %5 : vector<8x128xf32>
    %7 = tpu.iota {dimensions = array<i32: 1>} : vector<1x8xi32>
    %c1_i32 = arith.constant 1 : i32
    %8 = vector.broadcast %c1_i32 : i32 to vector<1x8xi32>
    %9 = arith.cmpi sge, %7, %8 : vector<1x8xi32>
    %c0_6 = arith.constant 0 : index
    %c0_7 = arith.constant 0 : index
    %c0_8 = arith.constant 0 : index
    %10 = vector.load %arg4[%c0_6, %c0_7, %c0_8] : memref<1x1x8xf32, #tpu.memory_space<vmem>>, vector<1x1x8xf32>
    %11 = vector.shape_cast %10 : vector<1x1x8xf32> to vector<1x8xf32>
    %cst_9 = arith.constant 0.000000e+00 : f32
    %12 = vector.broadcast %cst_9 : f32 to vector<1x8xf32>
    %13 = arith.select %9, %11, %12 : vector<1x8xi1>, vector<1x8xf32>
    %cst_10 = arith.constant dense<0.000000e+00> : vector<1x128xf32>
    %14 = tpu.matmul %13, %6, %cst_10 {dimension_numbers = #tpu.dot_dimension_numbers<[1], [0], [0], [1], [0, 0, 1, 1], [], []>} : vector<1x8xf32>, vector<8x128xf32>, vector<1x128xf32> -> vector<1x128xf32>
    %c0_11 = arith.constant 0 : index
    %c0_12 = arith.constant 0 : index
    %c0_13 = arith.constant 0 : index
    %15 = vector.load %arg5[%c0_11, %c0_12, %c0_13] : memref<1x1x8xf32, #tpu.memory_space<vmem>>, vector<1x1x8xf32>
    %16 = vector.shape_cast %15 : vector<1x1x8xf32> to vector<1x8xf32>
    %cst_14 = arith.constant dense<0.000000e+00> : vector<1xf32>
    %17 = vector.multi_reduction <add>, %16, %cst_14 [1] : vector<1x8xf32> to vector<1xf32>
    %18 = vector.shape_cast %17 : vector<1xf32> to vector<1x1xf32>
    %19 = tpu.reciprocal %18 {approx = true} : vector<1x1xf32> -> vector<1x1xf32>
    %20 = vector.broadcast %19 : vector<1x1xf32> to vector<1x128xf32>
    %21 = arith.mulf %14, %20 : vector<1x128xf32>
    %c0_15 = arith.constant 0 : index
    %c0_16 = arith.constant 0 : index
    %c0_17 = arith.constant 0 : index
    %22 = vector.load %arg6[%c0_15, %c0_16, %c0_17] : memref<1x1x128xf32, #tpu.memory_space<vmem>>, vector<1x1x128xf32>
    %23 = vector.shape_cast %22 : vector<1x1x128xf32> to vector<1x128xf32>
    %24 = vector.shape_cast %21 : vector<1x128xf32> to vector<1x1x128xf32>
    tpu.vector_store %arg6[%c0_15, %c0_16, %c0_17], %24 {strides = array<i32>} : memref<1x1x128xf32, #tpu.memory_space<vmem>>, vector<1x1x128xf32>,
    return
  }
  func.func @transform_0(%arg0: i32) -> (i32, i32, i32) {
    %c0_i32 = arith.constant 0 : i32
    %c0_i32_0 = arith.constant 0 : i32
    %c0_i32_1 = arith.constant 0 : i32
    return %arg0, %c0_i32, %c0_i32_0 : i32, i32, i32
  }
  func.func @transform_1(%arg0: i32) -> (i32, i32) {
    %c0_i32 = arith.constant 0 : i32
    %c0_i32_0 = arith.constant 0 : i32
    %c0_i32_1 = arith.constant 0 : i32
    return %c0_i32, %c0_i32_0 : i32, i32
  }
  func.func @transform_2(%arg0: i32) -> (i32, i32) {
    %c0_i32 = arith.constant 0 : i32
    %c0_i32_0 = arith.constant 0 : i32
    %c0_i32_1 = arith.constant 0 : i32
    return %c0_i32, %c0_i32_0 : i32, i32
  }
  func.func @transform_3(%arg0: i32) -> (i32, i32, i32) {
    %c0_i32 = arith.constant 0 : i32
    %c0_i32_0 = arith.constant 0 : i32
    %c0_i32_1 = arith.constant 0 : i32
    return %arg0, %c0_i32, %c0_i32_0 : i32, i32, i32
  }
  func.func @transform_4(%arg0: i32) -> (i32, i32, i32) {
    %c0_i32 = arith.constant 0 : i32
    %c0_i32_0 = arith.constant 0 : i32
    %c0_i32_1 = arith.constant 0 : i32
    return %arg0, %c0_i32, %c0_i32_0 : i32, i32, i32
  }
  func.func @transform_5(%arg0: i32) -> (i32, i32, i32) {
    %c0_i32 = arith.constant 0 : i32
    %c0_i32_0 = arith.constant 0 : i32
    %c0_i32_1 = arith.constant 0 : i32
    return %arg0, %c0_i32, %c0_i32_0 : i32, i32, i32
  }
}

</mosaic_0001>

<llo_original>
// kernel: tpu_custom_call.1
$region0: #{tpu_custom_call.1}
  #allocation0 [shape = 'u32[]', space=smem, size = 0x4, offset = 0x4, fixed_abs, tag = 'smem constant byte address 0x4 - core index']
  #allocation1 [shape = 'u32[72,128]{1,0:T(1,128)}', space=vmem, size = 0x9000, scoped, tag = 'internal scratch']
  %s0 = inlined_call_operand.hbm [shape: bf16[4,8,128], index: 0, kind: input, shape index: {}]
  %s1 = inlined_call_operand.hbm [shape: bf16[128,128], index: 1, kind: input, shape index: {}]
  %s2 = inlined_call_operand.vmem [shape: f32[1,128], index: 2, kind: input, shape index: {}]
  %s3 = inlined_call_operand.hbm [shape: f32[4,1,8], index: 3, kind: input, shape index: {}]
  %s4 = inlined_call_operand.hbm [shape: f32[4,1,8], index: 4, kind: input, shape index: {}]
  %s5 = inlined_call_operand.hbm [shape: f32[4,1,128], index: 5, kind: output, shape index: {}]
  %s6 = sld [smem:[#allocation0]]
  $region69: #{tpu_custom_call.1} parent=0
    _
  %s8 = ssub.s32 1, %s6
  %s9 = scalar_select 0, %s8, %s6
  $region1: #{tpu_custom_call.1} parent=0
    #allocation2 [shape = 'u8[4096]{0}', space=vmem, size = 0x1000, scoped, tag = 'input window, operand 0']
    #allocation3 [shape = 's32[2]{0}', space=sflag, size = 0x8, scoped, tag = 'scoped memory for tpu_custom_call.1']
    #allocation4 [shape = 's32[2]{0}', space=sflag, size = 0x8, scoped, tag = 'scoped memory for tpu_custom_call.1']
    #allocation5 [shape = 'u8[32768]{0}', space=vmem, size = 0x8000, scoped, tag = 'input window, operand 1, single buffered']
    #allocation6 [shape = 's32[1]{0}', space=sflag, size = 0x4, scoped, tag = 'scoped memory for tpu_custom_call.1']
    #allocation7 [shape = 'u8[1024]{0}', space=vmem, size = 0x400, scoped, tag = 'input window, operand 3']
    #allocation8 [shape = 'u8[1024]{0}', space=vmem, size = 0x400, scoped, tag = 'input window, operand 4']
    #allocation9 [shape = 'u8[1024]{0}', space=vmem, size = 0x400, scoped, tag = 'output window, operand 0']
    %10 = vsyncpa [#allocation3], 0
    %s11 = scalar_lea.sflag [#allocation3], 1
    %12 = vsyncpa %s11, 0
    %13 = vsyncpa [#allocation6], 0
    %14 = vsyncpa [#allocation4], 0
    %s15 = scalar_lea.sflag [#allocation4], 1
    %16 = vsyncpa %s15, 0
    loop: start=0, step=1, limit=6
    $region2: #{tpu_custom_call.1} parent=1 // loop_pre_header
      _
    $region3: #{tpu_custom_call.1} parent=1 // loop_header
      %s18 = sphi 0, %s22
      %p19 = scmp.ge.s32.totalorder %s18, 6
      %s28 = sphi 0, %s30
      %s31 = sphi 0, %s28
      %s32 = sphi 0, %s31
      %s48 = sphi 0, %s32
      %s52 = sphi 0, %s52
      %s54 = sphi 0, %s52
      %s55 = sphi 0, %s54
      %s69 = sphi 0, %s55
      %s73 = sphi 0, %s73
      %s75 = sphi 0, %s73
      %s76 = sphi 0, %s75
      %s90 = sphi 0, %s76
      %s96 = sphi 0, %s98
      %s99 = sphi 0, %s96
      %s100 = sphi 0, %s99
      %s116 = sphi 0, %s100
      %s122 = sphi 0, %s124
      %s125 = sphi 0, %s122
      %s126 = sphi 0, %s125
      %s142 = sphi 0, %s126
      %s148 = sphi 0, %s150
      %s151 = sphi 0, %s148
      %s152 = sphi 0, %s151
      %s168 = sphi 0, %s152
    $region4: #{tpu_custom_call.1} parent=1 // loop_header_branch
      %21 = sbr.rel (%p19) target = $region8
    $region5: #{tpu_custom_call.1} parent=1 // loop_body
      %s23 = ssub.s32 %s18, 1
      %s24 = ssub.s32 %s18, 2
      %s25 = sadd.s32 %s18, 1
      %s26 = ssub.s32 %s18, %s25
      %p27 = scmp.eq.s32.totalorder %s26, 0
      %s29 = sadd.s32 %s28, 1
      %s30 = scalar_select %p27, %s28, %s29
      %p33 = pneg %p27
      %p34 = scmp.eq.s32.totalorder %s18, 3
      %p35 = por %p33, %p34
      %p36 = scmp.ne.s32.totalorder %s28, %s31
      %p37 = scmp.eq.s32.totalorder %s18, 0
      %p38 = por %p36, %p37
      %p39 = scmp.ne.s32.totalorder %s28, %s31
      %p40 = scmp.eq.s32.totalorder %s23, 3
      %p41 = por %p39, %p40
      %p42 = scmp.ne.s32.totalorder %s31, %s32
      %p43 = scmp.eq.s32.totalorder %s23, 0
      %p44 = por %p42, %p43
      %p45 = scmp.ne.s32.totalorder %s31, %s32
      %p46 = scmp.eq.s32.totalorder %s24, 3
      %p47 = por %p45, %p46
      %p49 = scmp.ne.s32.totalorder %s32, %s48
      %p50 = scmp.eq.s32.totalorder %s24, 0
      %p51 = por %p49, %p50
      %s53 = sadd.s32 %s52, 1
      %p56 = scmp.eq.s32.totalorder %s18, 3
      %p57 = scmp.ne.s32.totalorder %s52, %s54
      %p58 = scmp.eq.s32.totalorder %s18, 0
      %p59 = por %p57, %p58
      %p60 = scmp.ne.s32.totalorder %s52, %s54
      %p61 = scmp.eq.s32.totalorder %s23, 3
      %p62 = por %p60, %p61
      %p63 = scmp.ne.s32.totalorder %s54, %s55
      %p64 = scmp.eq.s32.totalorder %s23, 0
      %p65 = por %p63, %p64
      %p66 = scmp.ne.s32.totalorder %s54, %s55
      %p67 = scmp.eq.s32.totalorder %s24, 3
      %p68 = por %p66, %p67
      %p70 = scmp.ne.s32.totalorder %s55, %s69
      %p71 = scmp.eq.s32.totalorder %s24, 0
      %p72 = por %p70, %p71
      %s74 = sadd.s32 %s73, 1
      %p77 = scmp.eq.s32.totalorder %s18, 3
      %p78 = scmp.ne.s32.totalorder %s73, %s75
      %p79 = scmp.eq.s32.totalorder %s18, 0
      %p80 = por %p78, %p79
      %p81 = scmp.ne.s32.totalorder %s73, %s75
      %p82 = scmp.eq.s32.totalorder %s23, 3
      %p83 = por %p81, %p82
      %p84 = scmp.ne.s32.totalorder %s75, %s76
      %p85 = scmp.eq.s32.totalorder %s23, 0
      %p86 = por %p84, %p85
      %p87 = scmp.ne.s32.totalorder %s75, %s76
      %p88 = scmp.eq.s32.totalorder %s24, 3
      %p89 = por %p87, %p88
      %p91 = scmp.ne.s32.totalorder %s76, %s90
      %p92 = scmp.eq.s32.totalorder %s24, 0
      %p93 = por %p91, %p92
      %s94 = ssub.s32 %s18, %s25
      %p95 = scmp.eq.s32.totalorder %s94, 0
      %s97 = sadd.s32 %s96, 1
      %s98 = scalar_select %p95, %s96, %s97
      %p101 = pneg %p95
      %p102 = scmp.eq.s32.totalorder %s18, 3
      %p103 = por %p101, %p102
      %p104 = scmp.ne.s32.totalorder %s96, %s99
      %p105 = scmp.eq.s32.totalorder %s18, 0
      %p106 = por %p104, %p105
      %p107 = scmp.ne.s32.totalorder %s96, %s99
      %p108 = scmp.eq.s32.totalorder %s23, 3
      %p109 = por %p107, %p108
      %p110 = scmp.ne.s32.totalorder %s99, %s100
      %p111 = scmp.eq.s32.totalorder %s23, 0
      %p112 = por %p110, %p111
      %p113 = scmp.ne.s32.totalorder %s99, %s100
      %p114 = scmp.eq.s32.totalorder %s24, 3
      %p115 = por %p113, %p114
      %p117 = scmp.ne.s32.totalorder %s100, %s116
      %p118 = scmp.eq.s32.totalorder %s24, 0
      %p119 = por %p117, %p118
      %s120 = ssub.s32 %s18, %s25
      %p121 = scmp.eq.s32.totalorder %s120, 0
      %s123 = sadd.s32 %s122, 1
      %s124 = scalar_select %p121, %s122, %s123
      %p127 = pneg %p121
      %p128 = scmp.eq.s32.totalorder %s18, 3
      %p129 = por %p127, %p128
      %p130 = scmp.ne.s32.totalorder %s122, %s125
      %p131 = scmp.eq.s32.totalorder %s18, 0
      %p132 = por %p130, %p131
      %p133 = scmp.ne.s32.totalorder %s122, %s125
      %p134 = scmp.eq.s32.totalorder %s23, 3
      %p135 = por %p133, %p134
      %p136 = scmp.ne.s32.totalorder %s125, %s126
      %p137 = scmp.eq.s32.totalorder %s23, 0
      %p138 = por %p136, %p137
      %p139 = scmp.ne.s32.totalorder %s125, %s126
      %p140 = scmp.eq.s32.totalorder %s24, 3
      %p141 = por %p139, %p140
      %p143 = scmp.ne.s32.totalorder %s126, %s142
      %p144 = scmp.eq.s32.totalorder %s24, 0
      %p145 = por %p143, %p144
      %s146 = ssub.s32 %s18, %s25
      %p147 = scmp.eq.s32.totalorder %s146, 0
      %s149 = sadd.s32 %s148, 1
      %s150 = scalar_select %p147, %s148, %s149
      %p153 = pneg %p147
      %p154 = scmp.eq.s32.totalorder %s18, 3
      %p155 = por %p153, %p154
      %p156 = scmp.ne.s32.totalorder %s148, %s151
      %p157 = scmp.eq.s32.totalorder %s18, 0
      %p158 = por %p156, %p157
      %p159 = scmp.ne.s32.totalorder %s148, %s151
      %p160 = scmp.eq.s32.totalorder %s23, 3
      %p161 = por %p159, %p160
      %p162 = scmp.ne.s32.totalorder %s151, %s152
      %p163 = scmp.eq.s32.totalorder %s23, 0
      %p164 = por %p162, %p163
      %p165 = scmp.ne.s32.totalorder %s151, %s152
      %p166 = scmp.eq.s32.totalorder %s24, 3
      %p167 = por %p165, %p166
      %p169 = scmp.ne.s32.totalorder %s152, %s168
      %p170 = scmp.eq.s32.totalorder %s24, 0
      %p171 = por %p169, %p170
      %p172 = scmp.le.s32.totalorder 1, %s18
      %p173 = scmp.lt.s32.totalorder %s18, 5
      %p174 = pnand %p172, %p173
      %p175 = pneg %p174
      // Predicated region
      $region9: #{tpu_custom_call.1} parent=5 // pred_check
        _
      $region10: #{tpu_custom_call.1} parent=5 // pred_check_branch
        %177 = sbr.rel (%p174) target = $region12
      $region11: #{tpu_custom_call.1} parent=5 // pred_region
        %s178 = ssub.s32 %s18, 1
        // Predicated region
        $region13: #{tpu_custom_call.1} parent=11 // pred_check
          %p179 = pneg %p65
        $region14: #{tpu_custom_call.1} parent=11 // pred_check_branch
          %181 = sbr.rel (%p179) target = $region16
        $region15: #{tpu_custom_call.1} parent=11 // pred_region
          %183 = vsyncadd [#allocation6], 0
          %s184 = sshll.u32 %s1, 4
          %s185 = int_to_ptr.hbm [resolvable:$true] %s184
          %s186 = sshll.u32 [#allocation5], 4
          %s187 = int_to_ptr.vmem [resolvable:$true] %s186
          %192 = dma.hbm_to_vmem [thread:$0]  %s185, 1024, %s187, [#allocation6], 64, 64, 4
        $region16: #{tpu_custom_call.1} parent=11 // pred_fallthru
          _
        // Predicated region
        $region17: #{tpu_custom_call.1} parent=11 // pred_check
          %p193 = pneg %p86
        $region18: #{tpu_custom_call.1} parent=11 // pred_check_branch
          %195 = sbr.rel (%p193) target = $region20
        $region19: #{tpu_custom_call.1} parent=11 // pred_region
          _
        $region20: #{tpu_custom_call.1} parent=11 // pred_fallthru
          _
      $region12: #{tpu_custom_call.1} parent=5 // pred_fallthru
        _
      %p196 = scmp.lt.s32.totalorder %s18, 4
      // Predicated region
      $region21: #{tpu_custom_call.1} parent=5 // pred_check
        %p197 = pneg %p196
      $region22: #{tpu_custom_call.1} parent=5 // pred_check_branch
        %199 = sbr.rel (%p197) target = $region24
      $region23: #{tpu_custom_call.1} parent=5 // pred_region
        // Predicated region
        $region25: #{tpu_custom_call.1} parent=23 // pred_check
          %p200 = pneg %p38
        $region26: #{tpu_custom_call.1} parent=23 // pred_check_branch
          %202 = sbr.rel (%p200) target = $region28
        $region27: #{tpu_custom_call.1} parent=23 // pred_region
          %s203 = sand.u32 %s18, 1
          %s204 = scalar_lea.sflag [#allocation3], %s203
          %s205 = sand.u32 %s28, 1
          %s206 = smul.addr %s205, 4
          %s207 = scalar_lea.vmem [#allocation2], %s206
          %209 = vsyncadd %s204, 0
          %s210 = smul.addr %s18, 4
          %s211 = scalar_lea.hbm %s0, %s210
          %s213 = sshll.u32 %s211, 4
          %s214 = int_to_ptr.hbm [resolvable:$true] %s213
          %s215 = sshll.u32 %s207, 4
          %s216 = int_to_ptr.vmem [resolvable:$true] %s215
          %218 = dma.hbm_to_vmem [thread:$0]  %s214, 64, %s216, %s204
        $region28: #{tpu_custom_call.1} parent=23 // pred_fallthru
          _
        // Predicated region
        $region29: #{tpu_custom_call.1} parent=23 // pred_check
          %p219 = pneg %p106
        $region30: #{tpu_custom_call.1} parent=23 // pred_check_branch
          %221 = sbr.rel (%p219) target = $region32
        $region31: #{tpu_custom_call.1} parent=23 // pred_region
          %s222 = sand.u32 %s18, 1
          %s223 = scalar_lea.sflag [#allocation3], %s222
          %s224 = sand.u32 %s96, 1
          %s225 = scalar_lea.vmem [#allocation7], %s224
          %227 = vsyncadd %s223, 0
          %s228 = scalar_lea.hbm %s3, %s18
          %s230 = sshll.u32 %s228, 4
          %s231 = int_to_ptr.hbm [resolvable:$true] %s230
          %s232 = sshll.u32 %s225, 4
          %s233 = int_to_ptr.vmem [resolvable:$true] %s232
          %235 = dma.hbm_to_vmem [thread:$0]  %s231, 16, %s233, %s223
        $region32: #{tpu_custom_call.1} parent=23 // pred_fallthru
          _
        // Predicated region
        $region33: #{tpu_custom_call.1} parent=23 // pred_check
          %p236 = pneg %p132
        $region34: #{tpu_custom_call.1} parent=23 // pred_check_branch
          %238 = sbr.rel (%p236) target = $region36
        $region35: #{tpu_custom_call.1} parent=23 // pred_region
          %s239 = sand.u32 %s18, 1
          %s240 = scalar_lea.sflag [#allocation3], %s239
          %s241 = sand.u32 %s122, 1
          %s242 = scalar_lea.vmem [#allocation8], %s241
          %244 = vsyncadd %s240, 0
          %s245 = scalar_lea.hbm %s4, %s18
          %s247 = sshll.u32 %s245, 4
          %s248 = int_to_ptr.hbm [resolvable:$true] %s247
          %s249 = sshll.u32 %s242, 4
          %s250 = int_to_ptr.vmem [resolvable:$true] %s249
          %252 = dma.hbm_to_vmem [thread:$0]  %s248, 16, %s250, %s240
        $region36: #{tpu_custom_call.1} parent=23 // pred_fallthru
          _
      $region24: #{tpu_custom_call.1} parent=5 // pred_fallthru
        _
      %p253 = scmp.le.s32.totalorder 1, %s18
      %p254 = scmp.lt.s32.totalorder %s18, 5
      %p255 = pnand %p253, %p254
      %p256 = pneg %p255
      // Predicated region
      $region37: #{tpu_custom_call.1} parent=5 // pred_check
        _
      $region38: #{tpu_custom_call.1} parent=5 // pred_check_branch
        %258 = sbr.rel (%p255) target = $region40
      $region39: #{tpu_custom_call.1} parent=5 // pred_region
        %s259 = ssub.s32 %s18, 1
        %s260 = sand.u32 %s23, 1
        %s261 = scalar_lea.sflag [#allocation3], %s260
        %s262 = sand.u32 %s31, 1
        %s263 = smul.addr %s262, 4
        %s264 = scalar_lea.vmem [#allocation2], %s263
        // Predicated region
        $region41: #{tpu_custom_call.1} parent=39 // pred_check
          %p265 = pneg %p44
        $region42: #{tpu_custom_call.1} parent=39 // pred_check_branch
          %267 = sbr.rel (%p265) target = $region44
        $region43: #{tpu_custom_call.1} parent=39 // pred_region
          %269 = dma.done %s261, 64
        $region44: #{tpu_custom_call.1} parent=39 // pred_fallthru
          _
        // Predicated region
        $region45: #{tpu_custom_call.1} parent=39 // pred_check
          %p270 = pneg %p65
        $region46: #{tpu_custom_call.1} parent=39 // pred_check_branch
          %272 = sbr.rel (%p270) target = $region48
        $region47: #{tpu_custom_call.1} parent=39 // pred_region
          %274 = dma.done [#allocation6], 1024
        $region48: #{tpu_custom_call.1} parent=39 // pred_fallthru
          _
        %s275 = sand.u32 %s23, 1
        %s276 = scalar_lea.sflag [#allocation3], %s275
        %s277 = sand.u32 %s99, 1
        %s278 = scalar_lea.vmem [#allocation7], %s277
        // Predicated region
        $region49: #{tpu_custom_call.1} parent=39 // pred_check
          %p279 = pneg %p112
        $region50: #{tpu_custom_call.1} parent=39 // pred_check_branch
          %281 = sbr.rel (%p279) target = $region52
        $region51: #{tpu_custom_call.1} parent=39 // pred_region
          %283 = dma.done %s276, 16
        $region52: #{tpu_custom_call.1} parent=39 // pred_fallthru
          _
        %s284 = sand.u32 %s23, 1
        %s285 = scalar_lea.sflag [#allocation3], %s284
        %s286 = sand.u32 %s125, 1
        %s287 = scalar_lea.vmem [#allocation8], %s286
        // Predicated region
        $region53: #{tpu_custom_call.1} parent=39 // pred_check
          %p288 = pneg %p138
        $region54: #{tpu_custom_call.1} parent=39 // pred_check_branch
          %290 = sbr.rel (%p288) target = $region56
        $region55: #{tpu_custom_call.1} parent=39 // pred_region
          %292 = dma.done %s285, 16
        $region56: #{tpu_custom_call.1} parent=39 // pred_fallthru
          _
        %s293 = sand.u32 %s23, 1
        %s294 = scalar_lea.sflag [#allocation3], %s293
        %s295 = sand.u32 %s31, 1
        %s296 = smul.addr %s295, 4
        %s297 = scalar_lea.vmem [#allocation2], %s296
        %p298 = pneg %p44
        %p299 = pneg %p41
        %p300 = pneg %p65
        %p301 = pneg %p62
        %p302 = pneg %p86
        %p303 = pneg %p83
        %s304 = sand.u32 %s23, 1
        %s305 = scalar_lea.sflag [#allocation3], %s304
        %s306 = sand.u32 %s99, 1
        %s307 = scalar_lea.vmem [#allocation7], %s306
        %p308 = pneg %p112
        %p309 = pneg %p109
        %s310 = sand.u32 %s23, 1
        %s311 = scalar_lea.sflag [#allocation3], %s310
        %s312 = sand.u32 %s125, 1
        %s313 = scalar_lea.vmem [#allocation8], %s312
        %p314 = pneg %p138
        %p315 = pneg %p135
        %p316 = pneg %p164
        %p317 = pneg %p161
        %s318 = sand.u32 %s151, 1
        %s319 = scalar_lea.sflag [#allocation4], %s318
        %s320 = sand.u32 %s151, 1
        %s321 = scalar_lea.vmem [#allocation9], %s320
        %v322 = vld [vmem:[%s264] sm:$0xf]
        %v323 = vld [vmem:[#allocation5] sm:$0xf]
        %v324 = vld [vmem:[#allocation5 + $0x4] sm:$0xf]
        %v325 = vld [vmem:[#allocation5 + $0x8] sm:$0xf]
        %v326 = vld [vmem:[#allocation5 + $0xc] sm:$0xf]
        %v327 = vld [vmem:[#allocation5 + $0x10] sm:$0xf]
        %v328 = vld [vmem:[#allocation5 + $0x14] sm:$0xf]
        %v329 = vld [vmem:[#allocation5 + $0x18] sm:$0xf]
        %v330 = vld [vmem:[#allocation5 + $0x1c] sm:$0xf]
        %v331 = vld [vmem:[#allocation5 + $0x20] sm:$0xf]
        %v332 = vld [vmem:[#allocation5 + $0x24] sm:$0xf]
        %v333 = vld [vmem:[#allocation5 + $0x28] sm:$0xf]
        %v334 = vld [vmem:[#allocation5 + $0x2c] sm:$0xf]
        %v335 = vld [vmem:[#allocation5 + $0x30] sm:$0xf]
        %v336 = vld [vmem:[#allocation5 + $0x34] sm:$0xf]
        %v337 = vld [vmem:[#allocation5 + $0x38] sm:$0xf]
        %v338 = vld [vmem:[#allocation5 + $0x3c] sm:$0xf]
        %v339 = vld [vmem:[%s2] sm:$0x1]
        %v341 = vperm.slane %v339, 0
        %v359 = vunpack.c.l.b16 %v323
        %v360 = vunpack.c.l.b16 %v324
        %v361 = vunpack.c.l.b16 %v325
        %v362 = vunpack.c.l.b16 %v326
        %v363 = vunpack.c.l.b16 %v327
        %v364 = vunpack.c.l.b16 %v328
        %v365 = vunpack.c.l.b16 %v329
        %v366 = vunpack.c.l.b16 %v330
        %v367 = vunpack.c.l.b16 %v331
        %v368 = vunpack.c.l.b16 %v332
        %v369 = vunpack.c.l.b16 %v333
        %v370 = vunpack.c.l.b16 %v334
        %v371 = vunpack.c.l.b16 %v335
        %v372 = vunpack.c.l.b16 %v336
        %v373 = vunpack.c.l.b16 %v337
        %v374 = vunpack.c.l.b16 %v338
        %v375 = vpack.c.b16 %v360, %v359
        %v376 = vpack.c.b16 %v362, %v361
        %v377 = vpack.c.b16 %v364, %v363
        %v378 = vpack.c.b16 %v366, %v365
        %v379 = vpack.c.b16 %v368, %v367
        %v380 = vpack.c.b16 %v370, %v369
        %v381 = vpack.c.b16 %v372, %v371
        %v382 = vpack.c.b16 %v374, %v373
        %391 = vmatpush.bf16.msra.mxu0 %v382
        %392 = vmatpush.bf16.msra.mxu0 %v381
        %393 = vmatpush.bf16.msra.mxu0 %v380
        %394 = vmatpush.bf16.msra.mxu0 %v379
        %395 = vmatpush.bf16.msra.mxu0 %v378
        %396 = vmatpush.bf16.msra.mxu0 %v377
        %397 = vmatpush.bf16.msra.mxu0 %v376
        %398 = vmatpush.bf16.msra.mxu0 %v375
        %399 = vmatmul.bf16.gmra.mxu0 %v322
        %v400 = vpop.f32.mrf.mxu0
        %v401 = vadd.f32 %v341, %v400
        %v402 = vpop.f32.mrf.mxu0
        %403 = vdwg.mxu0
        %v404 = vlaneseq
        %v405 = vand.u32 %v404, 127
        %vm406 = vcmp.ge.s32.totalorder %v405, 1
        %v407 = vld [vmem:[%s278] sm:$0x1]
        %v408 = vsel %vm406, %v407, 0.0
        %vm409 = vcmask 64512
        %v411 = vsel %vm409, %v408, 0
        %413 = vmatpush.msra.mxu0 0.0
        %414 = vmatpush.msra.mxu0 0.0
        %415 = vmatpush.msra.mxu0 0.0
        %416 = vmatpush.msra.mxu0 0.0
        %417 = vmatpush.msra.mxu0 0.0
        %418 = vmatpush.msra.mxu0 0.0
        %419 = vmatpush.msra.mxu0 0.0
        %420 = vmatpush.msra.mxu0 0.0
        %421 = vmatpush.msra.mxu0 0.0
        %422 = vmatpush.msra.mxu0 0.0
        %423 = vmatpush.msra.mxu0 0.0
        %424 = vmatpush.msra.mxu0 0.0
        %425 = vmatpush.msra.mxu0 0.0
        %426 = vmatpush.msra.mxu0 0.0
        %427 = vmatpush.msra.mxu0 0.0
        %428 = vmatpush.msra.mxu0 %v401
        %429 = vmatmul.f32.gmra.mxu0 %v411
        %v430 = vpop.f32.mrf.mxu0
        %v431 = vadd.f32 0.0, %v430
        %432 = vdwg.mxu0
        %v433 = vld [vmem:[%s287] sm:$0x1]
        %vm434 = vcmask 57344
        %v435 = vsel %vm434, %v433, 0.0
        %436 = vadd.xlane.f32.xlu0 %v435
        %v437 = vpop.xlane.xlu0 %436
        %v438 = vrcp.pop %v437
        %v439 = vmul.f32 %v431, %v438
        %440 = vst [vmem:[%s321] sm:$0x1] %v439
        %s441 = sand.u32 %s151, 1
        %s442 = scalar_lea.sflag [#allocation4], %s441
        %s443 = sand.u32 %s151, 1
        %s444 = scalar_lea.vmem [#allocation9], %s443
        // Predicated region
        $region57: #{tpu_custom_call.1} parent=39 // pred_check
          %p445 = pneg %p161
        $region58: #{tpu_custom_call.1} parent=39 // pred_check_branch
          %447 = sbr.rel (%p445) target = $region60
        $region59: #{tpu_custom_call.1} parent=39 // pred_region
          %449 = vsyncadd %s442, 0
          %s450 = scalar_lea.hbm %s5, %s23
          %s452 = sshll.u32 %s444, 4
          %s453 = int_to_ptr.vmem [resolvable:$true] %s452
          %s454 = sshll.u32 %s450, 4
          %s455 = int_to_ptr.hbm [resolvable:$true] %s454
          %457 = dma.vmem_to_hbm [thread:$0]  %s453, 16, %s455, %s442
        $region60: #{tpu_custom_call.1} parent=39 // pred_fallthru
          _
      $region40: #{tpu_custom_call.1} parent=5 // pred_fallthru
        _
      %p458 = scmp.le.s32.totalorder 2, %s18
      // Predicated region
      $region61: #{tpu_custom_call.1} parent=5 // pred_check
        %p459 = pneg %p458
      $region62: #{tpu_custom_call.1} parent=5 // pred_check_branch
        %461 = sbr.rel (%p459) target = $region64
      $region63: #{tpu_custom_call.1} parent=5 // pred_region
        %s462 = ssub.s32 %s18, 2
        // Predicated region
        $region65: #{tpu_custom_call.1} parent=63 // pred_check
          %p463 = pneg %p167
        $region66: #{tpu_custom_call.1} parent=63 // pred_check_branch
          %465 = sbr.rel (%p463) target = $region68
        $region67: #{tpu_custom_call.1} parent=63 // pred_region
          %s466 = sand.u32 %s152, 1
          %s467 = scalar_lea.sflag [#allocation4], %s466
          %s468 = sand.u32 %s152, 1
          %s469 = scalar_lea.vmem [#allocation9], %s468
          %471 = dma.done %s467, 16
        $region68: #{tpu_custom_call.1} parent=63 // pred_fallthru
          _
      $region64: #{tpu_custom_call.1} parent=5 // pred_fallthru
        _
    $region6: #{tpu_custom_call.1} parent=1 // loop_footer
      %s22 = sadd.s32 1, %s18
    $region7: #{tpu_custom_call.1} parent=1 // loop_footer_branch
      %17 = sbr.rel target = $region3
    $region8: #{tpu_custom_call.1} parent=1 // loop_exit
      _
    %472 = vsyncpa [#allocation3], 1
    %s473 = scalar_lea.sflag [#allocation3], 1
    %474 = vsyncpa %s473, 1
    %475 = vsyncpa [#allocation6], 1
    %476 = vsyncpa [#allocation4], 1
    %s477 = scalar_lea.sflag [#allocation4], 1
    %478 = vsyncpa %s477, 1

</llo_original>
